<compile_context>
chip_gen: v5e
topology: v5e:2x2
jax: 0.10.0
libtpu: 0.0.40
codegen_flags: <defaults>
</compile_context>

<pallas_src>
import functools

import jax
import jax.numpy as jnp
from jax.experimental import pallas as pl
from jax.experimental.pallas import tpu as pltpu

GENERATOR_PARAM = 100
LEAK_FACTOR = 0.2
NUM_TOPICS = 20

MAX_TILE_B = 1024  # rows per grid step; ~0.5 MB/step of output, amortizes step overhead


def _shared_generator_kernel(x_ref, w_ref, b_ref, o_ref):
    # x_ref: [tb, NUM_TOPICS], w_ref: [NUM_TOPICS, GENERATOR_PARAM],
    # b_ref: [1, GENERATOR_PARAM], o_ref: [tb, GENERATOR_PARAM]
    y = jnp.dot(
        x_ref[...],
        w_ref[...],
        preferred_element_type=jnp.float32,
        precision=jax.lax.Precision.HIGHEST,  # strict f32 accumulation; free (mem-bound)
    )
    y = y + b_ref[...]
    # LeakyReLU(0.2): for y<0, 0.2*y > y, so max(y, 0.2*y) == leaky_relu(y).
    o_ref[...] = jnp.maximum(y, LEAK_FACTOR * y).astype(o_ref.dtype)


def _round_up(n, m):
    return ((n + m - 1) // m) * m


def _choose_tiling(B):
    """Near-equal batch tiles; even #tiles (>=2) so v7x uses both TensorCores."""
    nt = max(1, -(-B // MAX_TILE_B))  # cdiv
    if B > 8:
        nt = max(nt, 2)               # give the 'parallel' axis >= 2 steps (v7x)
    if nt > 1 and nt % 2 != 0:
        nt += 1                       # even grid length -> balanced 2-TC split
    tb = _round_up(-(-B // nt), 8)    # tile rows: multiple of 8 (sublane)
    b_padded = nt * tb
    return tb, b_padded, nt


@functools.partial(jax.jit, static_argnames=("out_dtype",))
def shared_generator_forward(noise, weight_t, bias, out_dtype=jnp.float32):
    """noise: [B, NUM_TOPICS] f32; weight_t: [NUM_TOPICS, GENERATOR_PARAM];
    bias: [GENERATOR_PARAM]. Returns [B, GENERATOR_PARAM] in out_dtype."""
    B, K = noise.shape
    assert K == NUM_TOPICS

    tb, b_padded, nt = _choose_tiling(B)
    if b_padded != B:
        noise = jnp.pad(noise, ((0, b_padded - B), (0, 0)))

    bias2d = bias.astype(jnp.float32).reshape(1, GENERATOR_PARAM)
    weight_t = weight_t.astype(jnp.float32)

    itemsize_out = jnp.dtype(out_dtype).itemsize
    cost = pl.CostEstimate(
        flops=2 * b_padded * NUM_TOPICS * GENERATOR_PARAM,
        transcendentals=0,
        bytes_accessed=(
            b_padded * NUM_TOPICS * 4
            + NUM_TOPICS * GENERATOR_PARAM * 4
            + GENERATOR_PARAM * 4
            + b_padded * GENERATOR_PARAM * itemsize_out
        ),
    )

    out = pl.pallas_call(
        _shared_generator_kernel,
        out_shape=jax.ShapeDtypeStruct((b_padded, GENERATOR_PARAM), out_dtype),
        grid=(nt,),
        in_specs=[
            # Row tile of noise marches down the batch axis.
            pl.BlockSpec((tb, NUM_TOPICS), lambda i: (i, 0)),
            # Weight / bias: index_map ignores the batch index -> stays
            # resident in VMEM across all grid steps (no re-DMA per tile).
            pl.BlockSpec((NUM_TOPICS, GENERATOR_PARAM), lambda i: (0, 0)),
            pl.BlockSpec((1, GENERATOR_PARAM), lambda i: (0, 0)),
        ],
        # Last dim 100 == full array extent, so (tb, 100) is a legal block.
        out_specs=pl.BlockSpec((tb, GENERATOR_PARAM), lambda i: (i, 0)),
        compiler_params=pltpu.CompilerParams(
            dimension_semantics=("parallel",)  # shard row tiles across TCs (v7x)
        ),
        cost_estimate=cost,
    )(noise, weight_t, bias2d)

    # Padded batch rows hold LeakyReLU(bias) != 0; drop them here. When
    # b_padded == B this is a no-op view under jit.
    return out[:B]


def init_params(key):
    """Deterministic init mirroring nn.Linear(NUM_TOPICS, GENERATOR_PARAM):
    uniform(-1/sqrt(fan_in), 1/sqrt(fan_in)) for weight and bias."""
    kw, kb = jax.random.split(key)
    bound = 1.0 / jnp.sqrt(jnp.float32(NUM_TOPICS))
    # PyTorch weight is [out, in]; stored transposed [in, out] for the kernel.
    weight = jax.random.uniform(
        kw, (GENERATOR_PARAM, NUM_TOPICS), jnp.float32, -bound, bound
    )
    bias = jax.random.uniform(kb, (GENERATOR_PARAM,), jnp.float32, -bound, bound)
    weight_t = weight.T  # [NUM_TOPICS, GENERATOR_PARAM]
    return weight_t, bias


def _reference(noise, weight_t, bias):
    y = (
        jnp.dot(noise, weight_t, precision=jax.lax.Precision.HIGHEST)
        + bias[None, :]
    )
    return jnp.where(y >= 0.0, y, LEAK_FACTOR * y)


if __name__ == "__main__":
    key = jax.random.PRNGKey(0)
    k_noise, k_params, k_mid, k_big = jax.random.split(key, 4)

    weight_t, bias = init_params(k_params)

    # Small batch (single tile, grid of 1).
    B = 8
    noise = jax.random.normal(k_noise, (B, NUM_TOPICS), dtype=jnp.float32)
    out = jax.block_until_ready(shared_generator_forward(noise, weight_t, bias))
    ref = _reference(noise, weight_t, bias)
    assert out.shape == (B, GENERATOR_PARAM)
    assert jnp.allclose(out, ref, atol=2e-5, rtol=1e-5)

    # Non-multiple batch: balanced 2-step grid (tb=152, padded to 304).
    B2 = 300
    noise2 = jax.random.normal(k_mid, (B2, NUM_TOPICS), dtype=jnp.float32)
    out2 = jax.block_until_ready(shared_generator_forward(noise2, weight_t, bias))
    ref2 = _reference(noise2, weight_t, bias)
    assert out2.shape == (B2, GENERATOR_PARAM)
    assert jnp.allclose(out2, ref2, atol=2e-5, rtol=1e-5)

    # Larger batch: exercises MAX_TILE_B cap + even-grid rounding (nt=4).
    B3 = 2500
    noise3 = jax.random.normal(k_big, (B3, NUM_TOPICS), dtype=jnp.float32)
    out3 = jax.block_until_ready(shared_generator_forward(noise3, weight_t, bias))
    ref3 = _reference(noise3, weight_t, bias)
    assert out3.shape == (B3, GENERATOR_PARAM)
    assert jnp.allclose(out3, ref3, atol=2e-5, rtol=1e-5)

    print("KERNEL_OK")
</pallas_src>

<mosaic_0001>
module attributes {stable_mosaic.version = 11 : i64} {
  func.func @_shared_generator_kernel(%arg0: i32, %arg1: memref<8x20xf32, #tpu.memory_space<vmem>>, %arg2: memref<20x100xf32, #tpu.memory_space<vmem>>, %arg3: memref<1x100xf32, #tpu.memory_space<vmem>>, %arg4: memref<8x100xf32, #tpu.memory_space<vmem>>) attributes {dimension_semantics = [#tpu.dimension_semantics<parallel>], iteration_bounds = array<i64: 1>, scalar_prefetch = 0 : i64, scratch_operands = 0 : i64, tpu.core_type = #tpu.core_type<tc>, window_params = [{transform_indices = @transform_0, window_bounds = array<i64: 8, 20>}, {pipeline_mode = #tpu.pipeline_mode<synchronous>, transform_indices = @transform_1, window_bounds = array<i64: 20, 100>}, {pipeline_mode = #tpu.pipeline_mode<synchronous>, transform_indices = @transform_2, window_bounds = array<i64: 1, 100>}, {transform_indices = @transform_3, window_bounds = array<i64: 8, 100>}]} {
    %c0 = arith.constant 0 : index
    %c0_0 = arith.constant 0 : index
    %0 = vector.load %arg1[%c0, %c0_0] : memref<8x20xf32, #tpu.memory_space<vmem>>, vector<8x20xf32>
    %c0_1 = arith.constant 0 : index
    %c0_2 = arith.constant 0 : index
    %1 = vector.load %arg2[%c0_1, %c0_2] : memref<20x100xf32, #tpu.memory_space<vmem>>, vector<20x100xf32>
    %cst = arith.constant dense<0.000000e+00> : vector<8x100xf32>
    %2 = tpu.matmul %0, %1, %cst {dimension_numbers = #tpu.dot_dimension_numbers<[1], [0], [0], [1], [0, 0, 1, 1], [], []>, precision = #tpu.contract_precision<fp32>} : vector<8x20xf32>, vector<20x100xf32>, vector<8x100xf32> -> vector<8x100xf32>
    %c0_3 = arith.constant 0 : index
    %c0_4 = arith.constant 0 : index
    %3 = vector.load %arg3[%c0_3, %c0_4] : memref<1x100xf32, #tpu.memory_space<vmem>>, vector<1x100xf32>
    %4 = vector.broadcast %3 : vector<1x100xf32> to vector<8x100xf32>
    %5 = arith.addf %2, %4 : vector<8x100xf32>
    %cst_5 = arith.constant 2.000000e-01 : f32
    %6 = vector.broadcast %cst_5 : f32 to vector<8x100xf32>
    %7 = arith.mulf %6, %5 : vector<8x100xf32>
    %8 = arith.maximumf %5, %7 : vector<8x100xf32>
    %c0_6 = arith.constant 0 : index
    %c0_7 = arith.constant 0 : index
    %9 = vector.load %arg4[%c0_6, %c0_7] : memref<8x100xf32, #tpu.memory_space<vmem>>, vector<8x100xf32>
    tpu.vector_store %arg4[%c0_6, %c0_7], %8 {strides = array<i32>} : memref<8x100xf32, #tpu.memory_space<vmem>>, vector<8x100xf32>,
    return
  }
  func.func @transform_0(%arg0: i32) -> (i32, i32) {
    %c0_i32 = arith.constant 0 : i32
    %c0_i32_0 = arith.constant 0 : i32
    return %arg0, %c0_i32 : i32, i32
  }
  func.func @transform_1(%arg0: i32) -> (i32, i32) {
    %c0_i32 = arith.constant 0 : i32
    %c0_i32_0 = arith.constant 0 : i32
    %c0_i32_1 = arith.constant 0 : i32
    return %c0_i32, %c0_i32_0 : i32, i32
  }
  func.func @transform_2(%arg0: i32) -> (i32, i32) {
    %c0_i32 = arith.constant 0 : i32
    %c0_i32_0 = arith.constant 0 : i32
    %c0_i32_1 = arith.constant 0 : i32
    return %c0_i32, %c0_i32_0 : i32, i32
  }
  func.func @transform_3(%arg0: i32) -> (i32, i32) {
    %c0_i32 = arith.constant 0 : i32
    %c0_i32_0 = arith.constant 0 : i32
    return %arg0, %c0_i32 : i32, i32
  }
}

</mosaic_0001>

<llo_original>
// kernel: shared_generator_forward.1
$region0: #{shared_generator_forward.1}
  #allocation0 [shape = 'u32[]', space=smem, size = 0x4, offset = 0x4, fixed_abs, tag = 'smem constant byte address 0x4 - core index']
  #allocation1 [shape = 'u32[72,128]{1,0:T(1,128)}', space=vmem, size = 0x9000, scoped, tag = 'internal scratch']
  %s0 = inlined_call_operand.hbm [shape: f32[8,20], index: 0, kind: input, shape index: {}]
  %s1 = inlined_call_operand.hbm [shape: f32[20,100], index: 1, kind: input, shape index: {}]
  %s2 = inlined_call_operand.vmem [shape: f32[1,100], index: 2, kind: input, shape index: {}]
  %s3 = inlined_call_operand.hbm [shape: f32[8,100], index: 3, kind: output, shape index: {}]
  %s4 = sld [smem:[#allocation0]]
  $region30: #{shared_generator_forward.1} parent=0
    _
  %s6 = ssub.s32 1, %s4
  %s7 = scalar_select 0, %s6, %s4
  $region1: #{shared_generator_forward.1} parent=0
    #allocation2 [shape = 'u8[4096]{0}', space=vmem, size = 0x1000, scoped, tag = 'input window, operand 0, single buffered']
    #allocation3 [shape = 's32[1]{0}', space=sflag, size = 0x4, scoped, tag = 'scoped memory for shared_generator_forward.1']
    #allocation4 [shape = 's32[1]{0}', space=sflag, size = 0x4, scoped, tag = 'scoped memory for shared_generator_forward.1']
    #allocation5 [shape = 'u8[12288]{0}', space=vmem, size = 0x3000, scoped, tag = 'input window, operand 1, single buffered']
    #allocation6 [shape = 's32[1]{0}', space=sflag, size = 0x4, scoped, tag = 'scoped memory for shared_generator_forward.1']
    #allocation7 [shape = 'u8[4096]{0}', space=vmem, size = 0x1000, scoped, tag = 'output window, operand 0, single buffered']
    %8 = vsyncpa [#allocation3], 0
    %9 = vsyncpa [#allocation6], 0
    %10 = vsyncpa [#allocation4], 0
    // Predicated region
    $region2: #{shared_generator_forward.1} parent=1 // pred_check
      _
    $region3: #{shared_generator_forward.1} parent=1 // pred_check_branch
      %12 = sbr.rel (0) target = $region5
    $region4: #{shared_generator_forward.1} parent=1 // pred_region
      %14 = vsyncadd [#allocation3], 0
      %s16 = sshll.u32 %s0, 4
      %s17 = int_to_ptr.hbm [resolvable:$true] %s16
      %s18 = sshll.u32 [#allocation2], 4
      %s19 = int_to_ptr.vmem [resolvable:$true] %s18
      %21 = dma.hbm_to_vmem [thread:$0]  %s17, 128, %s19, [#allocation3]
    $region5: #{shared_generator_forward.1} parent=1 // pred_fallthru
      _
    // Predicated region
    $region6: #{shared_generator_forward.1} parent=1 // pred_check
      _
    $region7: #{shared_generator_forward.1} parent=1 // pred_check_branch
      %23 = sbr.rel (0) target = $region9
    $region8: #{shared_generator_forward.1} parent=1 // pred_region
      %25 = vsyncadd [#allocation6], 0
      %s26 = sshll.u32 %s1, 4
      %s27 = int_to_ptr.hbm [resolvable:$true] %s26
      %s28 = sshll.u32 [#allocation5], 4
      %s29 = int_to_ptr.vmem [resolvable:$true] %s28
      %34 = dma.hbm_to_vmem [thread:$0]  %s27, 384, %s29, [#allocation6], 128, 128, 8
    $region9: #{shared_generator_forward.1} parent=1 // pred_fallthru
      _
    // Predicated region
    $region10: #{shared_generator_forward.1} parent=1 // pred_check
      _
    $region11: #{shared_generator_forward.1} parent=1 // pred_check_branch
      %36 = sbr.rel (0) target = $region13
    $region12: #{shared_generator_forward.1} parent=1 // pred_region
      _
    $region13: #{shared_generator_forward.1} parent=1 // pred_fallthru
      _
    // Predicated region
    $region14: #{shared_generator_forward.1} parent=1 // pred_check
      _
    $region15: #{shared_generator_forward.1} parent=1 // pred_check_branch
      %38 = sbr.rel (0) target = $region17
    $region16: #{shared_generator_forward.1} parent=1 // pred_region
      %40 = dma.done [#allocation3], 128
    $region17: #{shared_generator_forward.1} parent=1 // pred_fallthru
      _
    // Predicated region
    $region18: #{shared_generator_forward.1} parent=1 // pred_check
      _
    $region19: #{shared_generator_forward.1} parent=1 // pred_check_branch
      %42 = sbr.rel (0) target = $region21
    $region20: #{shared_generator_forward.1} parent=1 // pred_region
      %44 = dma.done [#allocation6], 384
    $region21: #{shared_generator_forward.1} parent=1 // pred_fallthru
      _
    %v45 = vld [vmem:[#allocation2] sm:$0xff]
    %v46 = vld [vmem:[#allocation5] sm:$0xff]
    %v47 = vld [vmem:[#allocation5 + $0x8] sm:$0xff]
    %v48 = vld [vmem:[#allocation5 + $0x10] sm:$0xf]
    %v49 = vld [vmem:[%s2] sm:$0x1]
    %v51 = vperm.slane %v49, 0
    %vm53 = vcmask 162816
    %v55 = vsel %vm53, %v45, 0
    %vm57 = vcmask 1043456
    %v59 = vsel %vm57, %v48, 0
    %61 = vmatpush.msra.mxu0 0.0
    %62 = vmatpush.msra.mxu0 0.0
    %63 = vmatpush.msra.mxu0 0.0
    %64 = vmatpush.msra.mxu0 0.0
    %65 = vmatpush.msra.mxu0 0.0
    %66 = vmatpush.msra.mxu0 0.0
    %67 = vmatpush.msra.mxu0 0.0
    %68 = vmatpush.msra.mxu0 0.0
    %69 = vmatpush.msra.mxu0 0.0
    %70 = vmatpush.msra.mxu0 0.0
    %71 = vmatpush.msra.mxu0 0.0
    %72 = vmatpush.msra.mxu0 0.0
    %73 = vmatpush.msra.mxu0 0.0
    %v74 = vand.u32 %v59, 4294901760
    %75 = vmatpush.msra.mxu0 %v74
    %v76 = vand.u32 %v47, 4294901760
    %77 = vmatpush.msra.mxu0 %v76
    %v78 = vand.u32 %v46, 4294901760
    %79 = vmatpush.msra.mxu0 %v78
    %v80 = vand.u32 %v55, 4294901760
    %v81 = vsub.f32 %v55, %v80
    %v82 = vand.u32 %v81, 4294901760
    %v83 = vsub.f32 %v81, %v82
    %v84 = vand.u32 %v83, 4294901760
    %85 = vmatmul.f32.gmra.mxu0 %v84
    %v86 = vpop.f32.mrf.mxu0
    %v87 = vadd.f32 %v51, %v86
    %88 = vdwg.mxu0
    %89 = vmatpush.msra.mxu0 0.0
    %90 = vmatpush.msra.mxu0 0.0
    %91 = vmatpush.msra.mxu0 0.0
    %92 = vmatpush.msra.mxu0 0.0
    %93 = vmatpush.msra.mxu0 0.0
    %94 = vmatpush.msra.mxu0 0.0
    %95 = vmatpush.msra.mxu0 0.0
    %96 = vmatpush.msra.mxu0 0.0
    %97 = vmatpush.msra.mxu0 0.0
    %98 = vmatpush.msra.mxu0 0.0
    %99 = vmatpush.msra.mxu0 0.0
    %100 = vmatpush.msra.mxu0 0.0
    %101 = vmatpush.msra.mxu0 0.0
    %v102 = vand.u32 %v59, 4294901760
    %v103 = vsub.f32 %v59, %v102
    %v104 = vand.u32 %v103, 4294901760
    %v105 = vsub.f32 %v103, %v104
    %v106 = vand.u32 %v105, 4294901760
    %107 = vmatpush.msra.mxu0 %v106
    %v108 = vand.u32 %v47, 4294901760
    %v109 = vsub.f32 %v47, %v108
    %v110 = vand.u32 %v109, 4294901760
    %v111 = vsub.f32 %v109, %v110
    %v112 = vand.u32 %v111, 4294901760
    %113 = vmatpush.msra.mxu0 %v112
    %v114 = vand.u32 %v46, 4294901760
    %v115 = vsub.f32 %v46, %v114
    %v116 = vand.u32 %v115, 4294901760
    %v117 = vsub.f32 %v115, %v116
    %v118 = vand.u32 %v117, 4294901760
    %119 = vmatpush.msra.mxu0 %v118
    %v120 = vand.u32 %v55, 4294901760
    %121 = vmatmul.f32.gmra.mxu0 %v120
    %v122 = vpop.f32.mrf.mxu0
    %v123 = vadd.f32 %v87, %v122
    %124 = vdwg.mxu0
    %125 = vmatpush.msra.mxu0 0.0
    %126 = vmatpush.msra.mxu0 0.0
    %127 = vmatpush.msra.mxu0 0.0
    %128 = vmatpush.msra.mxu0 0.0
    %129 = vmatpush.msra.mxu0 0.0
    %130 = vmatpush.msra.mxu0 0.0
    %131 = vmatpush.msra.mxu0 0.0
    %132 = vmatpush.msra.mxu0 0.0
    %133 = vmatpush.msra.mxu0 0.0
    %134 = vmatpush.msra.mxu0 0.0
    %135 = vmatpush.msra.mxu0 0.0
    %136 = vmatpush.msra.mxu0 0.0
    %137 = vmatpush.msra.mxu0 0.0
    %v138 = vand.u32 %v59, 4294901760
    %v139 = vsub.f32 %v59, %v138
    %140 = vmatpush.msra.mxu0 %v139
    %v141 = vand.u32 %v47, 4294901760
    %v142 = vsub.f32 %v47, %v141
    %143 = vmatpush.msra.mxu0 %v142
    %v144 = vand.u32 %v46, 4294901760
    %v145 = vsub.f32 %v46, %v144
    %146 = vmatpush.msra.mxu0 %v145
    %v147 = vand.u32 %v55, 4294901760
    %v148 = vsub.f32 %v55, %v147
    %149 = vmatmul.f32.gmra.mxu0 %v148
    %v150 = vpop.f32.mrf.mxu0
    %v151 = vadd.f32 %v123, %v150
    %152 = vdwg.mxu0
    %153 = vmatpush.msra.mxu0 0.0
    %154 = vmatpush.msra.mxu0 0.0
    %155 = vmatpush.msra.mxu0 0.0
    %156 = vmatpush.msra.mxu0 0.0
    %157 = vmatpush.msra.mxu0 0.0
    %158 = vmatpush.msra.mxu0 0.0
    %159 = vmatpush.msra.mxu0 0.0
    %160 = vmatpush.msra.mxu0 0.0
    %161 = vmatpush.msra.mxu0 0.0
    %162 = vmatpush.msra.mxu0 0.0
    %163 = vmatpush.msra.mxu0 0.0
    %164 = vmatpush.msra.mxu0 0.0
    %165 = vmatpush.msra.mxu0 0.0
    %v166 = vand.u32 %v59, 4294901760
    %167 = vmatpush.msra.mxu0 %v166
    %v168 = vand.u32 %v47, 4294901760
    %169 = vmatpush.msra.mxu0 %v168
    %v170 = vand.u32 %v46, 4294901760
    %171 = vmatpush.msra.mxu0 %v170
    %v172 = vand.u32 %v55, 4294901760
    %v173 = vsub.f32 %v55, %v172
    %v174 = vand.u32 %v173, 4294901760
    %175 = vmatmul.f32.gmra.mxu0 %v174
    %v176 = vpop.f32.mrf.mxu0
    %v177 = vadd.f32 %v151, %v176
    %178 = vdwg.mxu0
    %179 = vmatpush.msra.mxu0 0.0
    %180 = vmatpush.msra.mxu0 0.0
    %181 = vmatpush.msra.mxu0 0.0
    %182 = vmatpush.msra.mxu0 0.0
    %183 = vmatpush.msra.mxu0 0.0
    %184 = vmatpush.msra.mxu0 0.0
    %185 = vmatpush.msra.mxu0 0.0
    %186 = vmatpush.msra.mxu0 0.0
    %187 = vmatpush.msra.mxu0 0.0
    %188 = vmatpush.msra.mxu0 0.0
    %189 = vmatpush.msra.mxu0 0.0
    %190 = vmatpush.msra.mxu0 0.0
    %191 = vmatpush.msra.mxu0 0.0
    %v192 = vand.u32 %v59, 4294901760
    %v193 = vsub.f32 %v59, %v192
    %v194 = vand.u32 %v193, 4294901760
    %195 = vmatpush.msra.mxu0 %v194
    %v196 = vand.u32 %v47, 4294901760
    %v197 = vsub.f32 %v47, %v196
    %v198 = vand.u32 %v197, 4294901760
    %199 = vmatpush.msra.mxu0 %v198
    %v200 = vand.u32 %v46, 4294901760
    %v201 = vsub.f32 %v46, %v200
    %v202 = vand.u32 %v201, 4294901760
    %203 = vmatpush.msra.mxu0 %v202
    %v204 = vand.u32 %v55, 4294901760
    %205 = vmatmul.f32.gmra.mxu0 %v204
    %v206 = vpop.f32.mrf.mxu0
    %v207 = vadd.f32 %v177, %v206
    %208 = vdwg.mxu0
    %209 = vmatpush.msra.mxu0 0.0
    %210 = vmatpush.msra.mxu0 0.0
    %211 = vmatpush.msra.mxu0 0.0
    %212 = vmatpush.msra.mxu0 0.0
    %213 = vmatpush.msra.mxu0 0.0
    %214 = vmatpush.msra.mxu0 0.0
    %215 = vmatpush.msra.mxu0 0.0
    %216 = vmatpush.msra.mxu0 0.0
    %217 = vmatpush.msra.mxu0 0.0
    %218 = vmatpush.msra.mxu0 0.0
    %219 = vmatpush.msra.mxu0 0.0
    %220 = vmatpush.msra.mxu0 0.0
    %221 = vmatpush.msra.mxu0 0.0
    %v222 = vand.u32 %v59, 4294901760
    %223 = vmatpush.msra.mxu0 %v222
    %v224 = vand.u32 %v47, 4294901760
    %225 = vmatpush.msra.mxu0 %v224
    %v226 = vand.u32 %v46, 4294901760
    %227 = vmatpush.msra.mxu0 %v226
    %v228 = vand.u32 %v55, 4294901760
    %229 = vmatmul.f32.gmra.mxu0 %v228
    %v230 = vpop.f32.mrf.mxu0
    %v231 = vadd.f32 %v207, %v230
    %232 = vdwg.mxu0
    %v233 = vmul.f32 %v231, 0.2
    %v234 = vmax.f32 %v231, %v233
    %vm235 = vcmask 818176
    %236 = vst.msk [vmem:[#allocation7] sm:$0xff] %vm235, %v234
    // Predicated region
    $region22: #{shared_generator_forward.1} parent=1 // pred_check
      _
    $region23: #{shared_generator_forward.1} parent=1 // pred_check_branch
      %238 = sbr.rel (0) target = $region25
    $region24: #{shared_generator_forward.1} parent=1 // pred_region
      %240 = vsyncadd [#allocation4], 0
      %s242 = sshll.u32 [#allocation7], 4
      %s243 = int_to_ptr.vmem [resolvable:$true] %s242
      %s244 = sshll.u32 %s3, 4
      %s245 = int_to_ptr.hbm [resolvable:$true] %s244
      %247 = dma.vmem_to_hbm [thread:$0]  %s243, 128, %s245, [#allocation4]
    $region25: #{shared_generator_forward.1} parent=1 // pred_fallthru
      _
    // Predicated region
    $region26: #{shared_generator_forward.1} parent=1 // pred_check
      _
    $region27: #{shared_generator_forward.1} parent=1 // pred_check_branch
      %249 = sbr.rel (0) target = $region29
    $region28: #{shared_generator_forward.1} parent=1 // pred_region
      %251 = dma.done [#allocation4], 128
    $region29: #{shared_generator_forward.1} parent=1 // pred_fallthru
      _
    %252 = vsyncpa [#allocation3], 1
    %253 = vsyncpa [#allocation6], 1
    %254 = vsyncpa [#allocation4], 1

</llo_original>
